<compile_context>
chip_gen: v6e
topology: v6e:2x2x1
jax: 0.10.0
libtpu: 0.0.40
codegen_flags: <defaults>
</compile_context>

<pallas_src>
import functools

import jax
import jax.numpy as jnp
from jax.experimental import pallas as pl
from jax.experimental.pallas import tpu as pltpu


def _mlp_softmax_kernel(x_ref, w1_ref, b1_ref, w2_ref, b2_ref, w3_ref, b3_ref,
                        o_ref):
    # Matmul inputs in bf16 (native MXU dtype), accumulation in f32.
    x = x_ref[...].astype(jnp.bfloat16)

    # fc1 + relu
    h1 = jnp.dot(x, w1_ref[...], preferred_element_type=jnp.float32)
    h1 = jnp.maximum(h1 + b1_ref[...], 0.0)

    # fc2 + relu
    h2 = jnp.dot(h1.astype(jnp.bfloat16), w2_ref[...],
                 preferred_element_type=jnp.float32)
    h2 = jnp.maximum(h2 + b2_ref[...], 0.0)

    # fc3
    logits = jnp.dot(h2.astype(jnp.bfloat16), w3_ref[...],
                     preferred_element_type=jnp.float32)
    logits = logits + b3_ref[...]

    # Numerically stable softmax over the last dim (exact reciprocal so rows
    # sum to 1 within f32 rounding).
    m = jnp.max(logits, axis=-1, keepdims=True)
    e = jnp.exp(logits - m)
    denom = jnp.sum(e, axis=-1, keepdims=True)
    o_ref[...] = (e * pl.reciprocal(denom, approx=False)).astype(o_ref.dtype)


@functools.partial(jax.jit, static_argnames=("tile_b",))
def network_forward(x, params, *, tile_b=512):
    """Fused forward pass of the Network module.

    x: [B, input_dim] float32
    params: dict with w1 [in,h] bf16, b1 [1,h] f32, w2 [h,h] bf16, b2 [1,h] f32,
            w3 [h,out] bf16, b3 [1,out] f32
    returns: [B, output_dim] float32 softmax probabilities.
    """
    B, in_dim = x.shape
    out_dim = params["w3"].shape[1]

    # Pad batch to a multiple of the tile (tile itself a multiple of 8 rows).
    b_pad = max(8, pl.cdiv(B, 8) * 8)
    tile_b = min(tile_b, b_pad)
    b_pad = pl.cdiv(b_pad, tile_b) * tile_b
    if b_pad != B:
        x = jnp.pad(x, ((0, b_pad - B), (0, 0)))

    grid = (b_pad // tile_b,)

    # Activations stream per grid step; weights/biases are resident (constant
    # index_map -> fetched once, kept in VMEM).
    x_spec = pl.BlockSpec((tile_b, in_dim), lambda i: (i, 0))
    out_spec = pl.BlockSpec((tile_b, out_dim), lambda i: (i, 0))
    resident = lambda arr: pl.BlockSpec(arr.shape, lambda i: (0, 0))

    out = pl.pallas_call(
        _mlp_softmax_kernel,
        out_shape=jax.ShapeDtypeStruct((b_pad, out_dim), jnp.float32),
        grid=grid,
        in_specs=[
            x_spec,
            resident(params["w1"]), resident(params["b1"]),
            resident(params["w2"]), resident(params["b2"]),
            resident(params["w3"]), resident(params["b3"]),
        ],
        out_specs=out_spec,
        compiler_params=pltpu.CompilerParams(
            dimension_semantics=("parallel",)),  # megacore split on v7x
    )(x, params["w1"], params["b1"], params["w2"], params["b2"],
      params["w3"], params["b3"])

    return out[:B]


def init_params(key, input_dim, output_dim, hidden_dim):
    """Deterministic init mimicking PyTorch nn.Linear default
    (uniform +-1/sqrt(fan_in)). Weights are stored transposed ([in, out])
    relative to PyTorch's [out, in] and cast to bf16; biases stay f32."""
    def linear(k, fan_in, fan_out):
        kw, kb = jax.random.split(k)
        bound = 1.0 / jnp.sqrt(fan_in)
        w = jax.random.uniform(kw, (fan_in, fan_out), jnp.float32, -bound, bound)
        b = jax.random.uniform(kb, (1, fan_out), jnp.float32, -bound, bound)
        return w.astype(jnp.bfloat16), b

    k1, k2, k3 = jax.random.split(key, 3)
    w1, b1 = linear(k1, input_dim, hidden_dim)
    w2, b2 = linear(k2, hidden_dim, hidden_dim)
    w3, b3 = linear(k3, hidden_dim, output_dim)
    return {"w1": w1, "b1": b1, "w2": w2, "b2": b2, "w3": w3, "b3": b3}


def reference_forward(x, params):
    """Pure-JAX reference mirroring the kernel's bf16-input / f32-accumulate
    matmuls exactly."""
    h1 = jnp.dot(x.astype(jnp.bfloat16), params["w1"],
                 preferred_element_type=jnp.float32) + params["b1"]
    h1 = jnp.maximum(h1, 0.0)
    h2 = jnp.dot(h1.astype(jnp.bfloat16), params["w2"],
                 preferred_element_type=jnp.float32) + params["b2"]
    h2 = jnp.maximum(h2, 0.0)
    logits = jnp.dot(h2.astype(jnp.bfloat16), params["w3"],
                     preferred_element_type=jnp.float32) + params["b3"]
    return jax.nn.softmax(logits, axis=-1)


if __name__ == "__main__":
    # Small shapes consistent with a discrete-control policy net
    # (e.g. CartPole: 4 obs dims, 2 actions).
    batch, input_dim, hidden_dim, output_dim = 2, 4, 32, 2

    key = jax.random.PRNGKey(0)
    kx, kp, kx2 = jax.random.split(key, 3)
    x = jax.random.normal(kx, (batch, input_dim), dtype=jnp.float32)
    params = init_params(kp, input_dim, output_dim, hidden_dim)

    # Small-batch path (single grid step, padded 2 -> 8 rows).
    out = network_forward(x, params)
    out = jax.block_until_ready(out)
    ref = reference_forward(x, params)
    assert out.shape == (batch, output_dim)
    assert jnp.allclose(out, ref, atol=2e-3, rtol=2e-3), (out, ref)
    assert jnp.allclose(jnp.sum(out, axis=-1), 1.0, atol=1e-4)

    # Larger rollout batch exercises the multi-step pipelined grid with
    # VMEM-resident weights (grid = (2,) at tile_b=512).
    big_batch = 1024
    x_big = jax.random.normal(kx2, (big_batch, input_dim), dtype=jnp.float32)
    out_big = jax.block_until_ready(network_forward(x_big, params))
    ref_big = reference_forward(x_big, params)
    assert out_big.shape == (big_batch, output_dim)
    assert jnp.allclose(out_big, ref_big, atol=2e-3, rtol=2e-3)
    assert jnp.allclose(jnp.sum(out_big, axis=-1), 1.0, atol=1e-4)

    print("KERNEL_OK")
</pallas_src>

<mosaic_0001>
module attributes {stable_mosaic.version = 11 : i64} {
  func.func @_mlp_softmax_kernel(%arg0: i32, %arg1: memref<8x4xf32, #tpu.memory_space<vmem>>, %arg2: memref<4x32xbf16, #tpu.memory_space<vmem>>, %arg3: memref<1x32xf32, #tpu.memory_space<vmem>>, %arg4: memref<32x32xbf16, #tpu.memory_space<vmem>>, %arg5: memref<1x32xf32, #tpu.memory_space<vmem>>, %arg6: memref<32x2xbf16, #tpu.memory_space<vmem>>, %arg7: memref<1x2xf32, #tpu.memory_space<vmem>>, %arg8: memref<8x2xf32, #tpu.memory_space<vmem>>) attributes {dimension_semantics = [#tpu.dimension_semantics<parallel>], iteration_bounds = array<i64: 1>, scalar_prefetch = 0 : i64, scratch_operands = 0 : i64, tpu.core_type = #tpu.core_type<tc>, window_params = [{transform_indices = @transform_0, window_bounds = array<i64: 8, 4>}, {pipeline_mode = #tpu.pipeline_mode<synchronous>, transform_indices = @transform_1, window_bounds = array<i64: 4, 32>}, {pipeline_mode = #tpu.pipeline_mode<synchronous>, transform_indices = @transform_2, window_bounds = array<i64: 1, 32>}, {pipeline_mode = #tpu.pipeline_mode<synchronous>, transform_indices = @transform_3, window_bounds = array<i64: 32, 32>}, {pipeline_mode = #tpu.pipeline_mode<synchronous>, transform_indices = @transform_4, window_bounds = array<i64: 1, 32>}, {pipeline_mode = #tpu.pipeline_mode<synchronous>, transform_indices = @transform_5, window_bounds = array<i64: 32, 2>}, {pipeline_mode = #tpu.pipeline_mode<synchronous>, transform_indices = @transform_6, window_bounds = array<i64: 1, 2>}, {transform_indices = @transform_7, window_bounds = array<i64: 8, 2>}]} {
    %c0 = arith.constant 0 : index
    %c0_0 = arith.constant 0 : index
    %0 = vector.load %arg1[%c0, %c0_0] : memref<8x4xf32, #tpu.memory_space<vmem>>, vector<8x4xf32>
    %1 = arith.truncf %0 : vector<8x4xf32> to vector<8x4xbf16>
    %c0_1 = arith.constant 0 : index
    %c0_2 = arith.constant 0 : index
    %2 = vector.load %arg2[%c0_1, %c0_2] : memref<4x32xbf16, #tpu.memory_space<vmem>>, vector<4x32xbf16>
    %cst = arith.constant dense<0.000000e+00> : vector<8x32xf32>
    %3 = tpu.matmul %1, %2, %cst {dimension_numbers = #tpu.dot_dimension_numbers<[1], [0], [0], [1], [0, 0, 1, 1], [], []>} : vector<8x4xbf16>, vector<4x32xbf16>, vector<8x32xf32> -> vector<8x32xf32>
    %c0_3 = arith.constant 0 : index
    %c0_4 = arith.constant 0 : index
    %4 = vector.load %arg3[%c0_3, %c0_4] : memref<1x32xf32, #tpu.memory_space<vmem>>, vector<1x32xf32>
    %5 = vector.broadcast %4 : vector<1x32xf32> to vector<8x32xf32>
    %6 = arith.addf %3, %5 : vector<8x32xf32>
    %cst_5 = arith.constant 0.000000e+00 : f32
    %7 = vector.broadcast %cst_5 : f32 to vector<8x32xf32>
    %8 = arith.maximumf %6, %7 : vector<8x32xf32>
    %9 = arith.truncf %8 : vector<8x32xf32> to vector<8x32xbf16>
    %c0_6 = arith.constant 0 : index
    %c0_7 = arith.constant 0 : index
    %10 = vector.load %arg4[%c0_6, %c0_7] : memref<32x32xbf16, #tpu.memory_space<vmem>>, vector<32x32xbf16>
    %cst_8 = arith.constant dense<0.000000e+00> : vector<8x32xf32>
    %11 = tpu.matmul %9, %10, %cst_8 {dimension_numbers = #tpu.dot_dimension_numbers<[1], [0], [0], [1], [0, 0, 1, 1], [], []>} : vector<8x32xbf16>, vector<32x32xbf16>, vector<8x32xf32> -> vector<8x32xf32>
    %c0_9 = arith.constant 0 : index
    %c0_10 = arith.constant 0 : index
    %12 = vector.load %arg5[%c0_9, %c0_10] : memref<1x32xf32, #tpu.memory_space<vmem>>, vector<1x32xf32>
    %13 = vector.broadcast %12 : vector<1x32xf32> to vector<8x32xf32>
    %14 = arith.addf %11, %13 : vector<8x32xf32>
    %cst_11 = arith.constant 0.000000e+00 : f32
    %15 = vector.broadcast %cst_11 : f32 to vector<8x32xf32>
    %16 = arith.maximumf %14, %15 : vector<8x32xf32>
    %17 = arith.truncf %16 : vector<8x32xf32> to vector<8x32xbf16>
    %c0_12 = arith.constant 0 : index
    %c0_13 = arith.constant 0 : index
    %18 = vector.load %arg6[%c0_12, %c0_13] : memref<32x2xbf16, #tpu.memory_space<vmem>>, vector<32x2xbf16>
    %cst_14 = arith.constant dense<0.000000e+00> : vector<8x2xf32>
    %19 = tpu.matmul %17, %18, %cst_14 {dimension_numbers = #tpu.dot_dimension_numbers<[1], [0], [0], [1], [0, 0, 1, 1], [], []>} : vector<8x32xbf16>, vector<32x2xbf16>, vector<8x2xf32> -> vector<8x2xf32>
    %c0_15 = arith.constant 0 : index
    %c0_16 = arith.constant 0 : index
    %20 = vector.load %arg7[%c0_15, %c0_16] : memref<1x2xf32, #tpu.memory_space<vmem>>, vector<1x2xf32>
    %21 = vector.broadcast %20 : vector<1x2xf32> to vector<8x2xf32>
    %22 = arith.addf %19, %21 : vector<8x2xf32>
    %cst_17 = arith.constant dense<0xFF800000> : vector<8xf32>
    %23 = vector.multi_reduction <maximumf>, %22, %cst_17 [1] : vector<8x2xf32> to vector<8xf32>
    %24 = vector.shape_cast %23 : vector<8xf32> to vector<8x1xf32>
    %25 = vector.broadcast %24 : vector<8x1xf32> to vector<8x2xf32>
    %26 = arith.subf %22, %25 : vector<8x2xf32>
    %27 = math.exp %26 : vector<8x2xf32>
    %cst_18 = arith.constant dense<0.000000e+00> : vector<8xf32>
    %28 = vector.multi_reduction <add>, %27, %cst_18 [1] : vector<8x2xf32> to vector<8xf32>
    %29 = vector.shape_cast %28 : vector<8xf32> to vector<8x1xf32>
    %30 = tpu.reciprocal %29 : vector<8x1xf32> -> vector<8x1xf32>
    %31 = vector.broadcast %30 : vector<8x1xf32> to vector<8x2xf32>
    %32 = arith.mulf %27, %31 : vector<8x2xf32>
    %c0_19 = arith.constant 0 : index
    %c0_20 = arith.constant 0 : index
    %33 = vector.load %arg8[%c0_19, %c0_20] : memref<8x2xf32, #tpu.memory_space<vmem>>, vector<8x2xf32>
    tpu.vector_store %arg8[%c0_19, %c0_20], %32 {strides = array<i32>} : memref<8x2xf32, #tpu.memory_space<vmem>>, vector<8x2xf32>,
    return
  }
  func.func @transform_0(%arg0: i32) -> (i32, i32) {
    %c0_i32 = arith.constant 0 : i32
    %c0_i32_0 = arith.constant 0 : i32
    return %arg0, %c0_i32 : i32, i32
  }
  func.func @transform_1(%arg0: i32) -> (i32, i32) {
    %c0_i32 = arith.constant 0 : i32
    %c0_i32_0 = arith.constant 0 : i32
    %c0_i32_1 = arith.constant 0 : i32
    return %c0_i32, %c0_i32_0 : i32, i32
  }
  func.func @transform_2(%arg0: i32) -> (i32, i32) {
    %c0_i32 = arith.constant 0 : i32
    %c0_i32_0 = arith.constant 0 : i32
    %c0_i32_1 = arith.constant 0 : i32
    return %c0_i32, %c0_i32_0 : i32, i32
  }
  func.func @transform_3(%arg0: i32) -> (i32, i32) {
    %c0_i32 = arith.constant 0 : i32
    %c0_i32_0 = arith.constant 0 : i32
    %c0_i32_1 = arith.constant 0 : i32
    return %c0_i32, %c0_i32_0 : i32, i32
  }
  func.func @transform_4(%arg0: i32) -> (i32, i32) {
    %c0_i32 = arith.constant 0 : i32
    %c0_i32_0 = arith.constant 0 : i32
    %c0_i32_1 = arith.constant 0 : i32
    return %c0_i32, %c0_i32_0 : i32, i32
  }
  func.func @transform_5(%arg0: i32) -> (i32, i32) {
    %c0_i32 = arith.constant 0 : i32
    %c0_i32_0 = arith.constant 0 : i32
    %c0_i32_1 = arith.constant 0 : i32
    return %c0_i32, %c0_i32_0 : i32, i32
  }
  func.func @transform_6(%arg0: i32) -> (i32, i32) {
    %c0_i32 = arith.constant 0 : i32
    %c0_i32_0 = arith.constant 0 : i32
    %c0_i32_1 = arith.constant 0 : i32
    return %c0_i32, %c0_i32_0 : i32, i32
  }
  func.func @transform_7(%arg0: i32) -> (i32, i32) {
    %c0_i32 = arith.constant 0 : i32
    %c0_i32_0 = arith.constant 0 : i32
    return %arg0, %c0_i32 : i32, i32
  }
}

</mosaic_0001>

<llo_original>
// kernel: network_forward.1
$region0: #{network_forward.1}
  #allocation0 [shape = 'u32[]', space=smem, size = 0x4, offset = 0x4, fixed_abs, tag = 'smem constant byte address 0x4 - core index']
  #allocation1 [shape = 'u32[144,128]{1,0:T(1,128)}', space=vmem, size = 0x12000, scoped, tag = 'internal scratch']
  %s0 = inlined_call_operand.vmem [shape: f32[8,4], index: 0, kind: input, shape index: {}]
  %s1 = inlined_call_operand.vmem [shape: bf16[4,32], index: 1, kind: input, shape index: {}]
  %s2 = inlined_call_operand.vmem [shape: f32[1,32], index: 2, kind: input, shape index: {}]
  %s3 = inlined_call_operand.vmem [shape: bf16[32,32], index: 3, kind: input, shape index: {}]
  %s4 = inlined_call_operand.vmem [shape: f32[1,32], index: 4, kind: input, shape index: {}]
  %s5 = inlined_call_operand.vmem [shape: bf16[32,2], index: 5, kind: input, shape index: {}]
  %s6 = inlined_call_operand.vmem [shape: f32[1,2], index: 6, kind: input, shape index: {}]
  %s7 = inlined_call_operand.vmem [shape: f32[8,2], index: 7, kind: output, shape index: {}]
  %s8 = sld [smem:[#allocation0]]
  $region38: #{network_forward.1} parent=0
    _
  %s10 = ssub.s32 1, %s8
  %s11 = scalar_select 0, %s10, %s8
  // Predicated region
  $region2: #{network_forward.1} parent=0 // pred_check
    _
  $region3: #{network_forward.1} parent=0 // pred_check_branch
    %13 = sbr.rel (0) target = $region5
  $region4: #{network_forward.1} parent=0 // pred_region
    _
  $region5: #{network_forward.1} parent=0 // pred_fallthru
    _
  // Predicated region
  $region6: #{network_forward.1} parent=0 // pred_check
    _
  $region7: #{network_forward.1} parent=0 // pred_check_branch
    %15 = sbr.rel (0) target = $region9
  $region8: #{network_forward.1} parent=0 // pred_region
    _
  $region9: #{network_forward.1} parent=0 // pred_fallthru
    _
  // Predicated region
  $region10: #{network_forward.1} parent=0 // pred_check
    _
  $region11: #{network_forward.1} parent=0 // pred_check_branch
    %17 = sbr.rel (0) target = $region13
  $region12: #{network_forward.1} parent=0 // pred_region
    _
  $region13: #{network_forward.1} parent=0 // pred_fallthru
    _
  // Predicated region
  $region14: #{network_forward.1} parent=0 // pred_check
    _
  $region15: #{network_forward.1} parent=0 // pred_check_branch
    %19 = sbr.rel (0) target = $region17
  $region16: #{network_forward.1} parent=0 // pred_region
    _
  $region17: #{network_forward.1} parent=0 // pred_fallthru
    _
  // Predicated region
  $region18: #{network_forward.1} parent=0 // pred_check
    _
  $region19: #{network_forward.1} parent=0 // pred_check_branch
    %21 = sbr.rel (0) target = $region21
  $region20: #{network_forward.1} parent=0 // pred_region
    _
  $region21: #{network_forward.1} parent=0 // pred_fallthru
    _
  // Predicated region
  $region22: #{network_forward.1} parent=0 // pred_check
    _
  $region23: #{network_forward.1} parent=0 // pred_check_branch
    %23 = sbr.rel (0) target = $region25
  $region24: #{network_forward.1} parent=0 // pred_region
    _
  $region25: #{network_forward.1} parent=0 // pred_fallthru
    _
  // Predicated region
  $region26: #{network_forward.1} parent=0 // pred_check
    _
  $region27: #{network_forward.1} parent=0 // pred_check_branch
    %25 = sbr.rel (0) target = $region29
  $region28: #{network_forward.1} parent=0 // pred_region
    _
  $region29: #{network_forward.1} parent=0 // pred_fallthru
    _
  %v27 = vld [vmem:[%s0] sm:$0xff]
  %v28 = vpack.c.bf16 %v27, %v27
  %v29 = vld [vmem:[%s1] sm:$0x3]
  %v30 = vld [vmem:[%s2] sm:$0x1]
  %v32 = vlaneseq
  %v33 = vshrl.u32 %v32, 7
  %v34 = vsub.s32 0, %v33
  %v35 = vrot.slane %v30, %v34
  %vm37 = vcmask 31744
  %v39 = vsel %vm37, %v28, 0
  %vm41 = vcmask 1041408
  %v43 = vsel %vm41, %v29, 0
  %45 = vmatprep.subr.bf16.mxu0 0
  %46 = vmatpush1.bf16.msra.mxu0 0
  %47 = vmatprep.subr.bf16.mxu0 0
  %48 = vmatpush1.bf16.msra.mxu0 0
  %49 = vmatprep.subr.bf16.mxu0 0
  %50 = vmatpush1.bf16.msra.mxu0 0
  %51 = vmatprep.subr.bf16.mxu0 0
  %52 = vmatpush1.bf16.msra.mxu0 0
  %53 = vmatprep.subr.bf16.mxu0 0
  %54 = vmatpush1.bf16.msra.mxu0 0
  %55 = vmatprep.subr.bf16.mxu0 0
  %56 = vmatpush1.bf16.msra.mxu0 0
  %57 = vmatprep.subr.bf16.mxu0 0
  %58 = vmatpush1.bf16.msra.mxu0 0
  %59 = vmatprep.subr.bf16.mxu0 0
  %60 = vmatpush1.bf16.msra.mxu0 %v43
  %61 = vmatprep.subr.bf16.mxu0 0
  %62 = vmatpush2.bf16.msra.mxu0 0
  %63 = vmatprep.subr.bf16.mxu0 0
  %64 = vmatpush2.bf16.msra.mxu0 0
  %65 = vmatprep.subr.bf16.mxu0 0
  %66 = vmatpush2.bf16.msra.mxu0 0
  %67 = vmatprep.subr.bf16.mxu0 0
  %68 = vmatpush2.bf16.msra.mxu0 0
  %69 = vmatprep.subr.bf16.mxu0 0
  %70 = vmatpush2.bf16.msra.mxu0 0
  %71 = vmatprep.subr.bf16.mxu0 0
  %72 = vmatpush2.bf16.msra.mxu0 0
  %73 = vmatprep.subr.bf16.mxu0 0
  %74 = vmatpush2.bf16.msra.mxu0 0
  %75 = vmatprep.subr.bf16.mxu0 0
  %76 = vmatpush2.bf16.msra.mxu0 0
  %77 = vmatprep.mubr.bf16.mxu0 0
  %78 = vmatmul.mubr.bf16.gmra.mxu0 %v39
  %v79 = vpop.f32.mrf.mxu0
  %v80 = vadd.f32 %v35, %v79
  %v81 = vpop.f32.mrf.mxu0
  %v82 = vpop.f32.mrf.mxu0
  %v83 = vpop.f32.mrf.mxu0
  %84 = vdwg.mxu0
  %v85 = vmax.f32 %v80, 0.0
  %v86 = vpack.c.bf16 %v85, %v85
  %v87 = vld [vmem:[%s3] sm:$0xf]
  %v88 = vld [vmem:[%s3 + $0x4] sm:$0xf]
  %v89 = vld [vmem:[%s3 + $0x8] sm:$0xf]
  %v90 = vld [vmem:[%s3 + $0xc] sm:$0xf]
  %v91 = vld [vmem:[%s4] sm:$0x1]
  %v93 = vlaneseq
  %v94 = vshrl.u32 %v93, 7
  %v95 = vsub.s32 0, %v94
  %v96 = vrot.slane %v91, %v95
  %v102 = vunpack.c.l.b16 %v87
  %v103 = vunpack.c.l.b16 %v88
  %v104 = vunpack.c.l.b16 %v89
  %v105 = vunpack.c.l.b16 %v90
  %v106 = vpack.c.b16 %v103, %v102
  %v107 = vpack.c.b16 %v105, %v104
  %vm110 = vcmask 261120
  %v112 = vsel %vm110, %v86, 0
  %114 = vmatprep.subr.bf16.mxu0 0
  %115 = vmatpush1.bf16.msra.mxu0 0
  %116 = vmatprep.subr.bf16.mxu0 0
  %117 = vmatpush1.bf16.msra.mxu0 0
  %118 = vmatprep.subr.bf16.mxu0 0
  %119 = vmatpush1.bf16.msra.mxu0 0
  %120 = vmatprep.subr.bf16.mxu0 0
  %121 = vmatpush1.bf16.msra.mxu0 0
  %122 = vmatprep.subr.bf16.mxu0 0
  %123 = vmatpush1.bf16.msra.mxu0 0
  %124 = vmatprep.subr.bf16.mxu0 0
  %125 = vmatpush1.bf16.msra.mxu0 0
  %126 = vmatprep.subr.bf16.mxu0 0
  %127 = vmatpush1.bf16.msra.mxu0 %v107
  %128 = vmatprep.subr.bf16.mxu0 0
  %129 = vmatpush1.bf16.msra.mxu0 %v106
  %130 = vmatprep.subr.bf16.mxu0 0
  %131 = vmatpush2.bf16.msra.mxu0 0
  %132 = vmatprep.subr.bf16.mxu0 0
  %133 = vmatpush2.bf16.msra.mxu0 0
  %134 = vmatprep.subr.bf16.mxu0 0
  %135 = vmatpush2.bf16.msra.mxu0 0
  %136 = vmatprep.subr.bf16.mxu0 0
  %137 = vmatpush2.bf16.msra.mxu0 0
  %138 = vmatprep.subr.bf16.mxu0 0
  %139 = vmatpush2.bf16.msra.mxu0 0
  %140 = vmatprep.subr.bf16.mxu0 0
  %141 = vmatpush2.bf16.msra.mxu0 0
  %142 = vmatprep.subr.bf16.mxu0 0
  %143 = vmatpush2.bf16.msra.mxu0 0
  %144 = vmatprep.subr.bf16.mxu0 0
  %145 = vmatpush2.bf16.msra.mxu0 0
  %146 = vmatprep.mubr.bf16.mxu0 0
  %147 = vmatmul.mubr.bf16.gmra.mxu0 %v112
  %v148 = vpop.f32.mrf.mxu0
  %v149 = vadd.f32 %v96, %v148
  %v150 = vpop.f32.mrf.mxu0
  %v151 = vpop.f32.mrf.mxu0
  %v152 = vpop.f32.mrf.mxu0
  %153 = vdwg.mxu0
  %v154 = vmax.f32 %v149, 0.0
  %v155 = vpack.c.bf16 %v154, %v154
  %v156 = vld [vmem:[%s5] sm:$0xf]
  %v157 = vld [vmem:[%s5 + $0x4] sm:$0xf]
  %v158 = vld [vmem:[%s5 + $0x8] sm:$0xf]
  %v159 = vld [vmem:[%s5 + $0xc] sm:$0xf]
  %v160 = vld [vmem:[%s6] sm:$0x1]
  %v162 = vlaneseq
  %v163 = vshrl.u32 %v162, 7
  %v164 = vsub.s32 0, %v163
  %v165 = vrot.slane %v160, %v164
  %v171 = vunpack.c.l.b16 %v156
  %v172 = vunpack.c.l.b16 %v157
  %v173 = vunpack.c.l.b16 %v158
  %v174 = vunpack.c.l.b16 %v159
  %v175 = vpack.c.b16 %v172, %v171
  %v176 = vpack.c.b16 %v174, %v173
  %v180 = vsel %vm110, %v155, 0
  %182 = vmatprep.subr.bf16.mxu0 0
  %183 = vmatpush1.bf16.msra.mxu0 0
  %184 = vmatprep.subr.bf16.mxu0 0
  %185 = vmatpush1.bf16.msra.mxu0 0
  %186 = vmatprep.subr.bf16.mxu0 0
  %187 = vmatpush1.bf16.msra.mxu0 0
  %188 = vmatprep.subr.bf16.mxu0 0
  %189 = vmatpush1.bf16.msra.mxu0 0
  %190 = vmatprep.subr.bf16.mxu0 0
  %191 = vmatpush1.bf16.msra.mxu0 0
  %192 = vmatprep.subr.bf16.mxu0 0
  %193 = vmatpush1.bf16.msra.mxu0 0
  %194 = vmatprep.subr.bf16.mxu0 0
  %195 = vmatpush1.bf16.msra.mxu0 %v176
  %196 = vmatprep.subr.bf16.mxu0 0
  %197 = vmatpush1.bf16.msra.mxu0 %v175
  %198 = vmatprep.subr.bf16.mxu0 0
  %199 = vmatpush2.bf16.msra.mxu0 0
  %200 = vmatprep.subr.bf16.mxu0 0
  %201 = vmatpush2.bf16.msra.mxu0 0
  %202 = vmatprep.subr.bf16.mxu0 0
  %203 = vmatpush2.bf16.msra.mxu0 0
  %204 = vmatprep.subr.bf16.mxu0 0
  %205 = vmatpush2.bf16.msra.mxu0 0
  %206 = vmatprep.subr.bf16.mxu0 0
  %207 = vmatpush2.bf16.msra.mxu0 0
  %208 = vmatprep.subr.bf16.mxu0 0
  %209 = vmatpush2.bf16.msra.mxu0 0
  %210 = vmatprep.subr.bf16.mxu0 0
  %211 = vmatpush2.bf16.msra.mxu0 0
  %212 = vmatprep.subr.bf16.mxu0 0
  %213 = vmatpush2.bf16.msra.mxu0 0
  %214 = vmatprep.mubr.bf16.mxu0 0
  %215 = vmatmul.mubr.bf16.gmra.mxu0 %v180
  %v216 = vpop.f32.mrf.mxu0
  %v217 = vadd.f32 %v165, %v216
  %v218 = vpop.f32.mrf.mxu0
  %v219 = vpop.f32.mrf.mxu0
  %v220 = vpop.f32.mrf.mxu0
  %221 = vdwg.mxu0
  %vm222 = vcmask 15360
  %v223 = vsel %vm222, %v217, -inf
  %224 = vmax.xlane.f32.xlu0 %v223
  %v225 = vpop.xlane.xlu0 %224
  %v226 = vsub.f32 %v217, %v225
  %v227 = vmul.f32 %v226, 1.442695
  %v228 = vpow.pop %v227
  %v229 = vsel %vm222, %v228, 0.0
  %230 = vadd.xlane.f32.xlu0 %v229
  %v231 = vpop.xlane.xlu0 %230
  %v232 = vrcp.pop %v231
  %v233 = vmul.f32 %v228, %v232
  %234 = vst.msk [vmem:[%s7] sm:$0xff] %vm222, %v233
  // Predicated region
  $region30: #{network_forward.1} parent=0 // pred_check
    _
  $region31: #{network_forward.1} parent=0 // pred_check_branch
    %236 = sbr.rel (0) target = $region33
  $region32: #{network_forward.1} parent=0 // pred_region
    _
  $region33: #{network_forward.1} parent=0 // pred_fallthru
    _
  // Predicated region
  $region34: #{network_forward.1} parent=0 // pred_check
    _
  $region35: #{network_forward.1} parent=0 // pred_check_branch
    %238 = sbr.rel (0) target = $region37
  $region36: #{network_forward.1} parent=0 // pred_region
    _
  $region37: #{network_forward.1} parent=0 // pred_fallthru
    _

</llo_original>
